<compile_context>
chip_gen: v5e
topology: v5e:2x2
jax: 0.10.0
libtpu: 0.0.40
codegen_flags: <defaults>
</compile_context>

<pallas_src>
import jax
import jax.numpy as jnp
from jax import lax
from jax.experimental import pallas as pl
from jax.experimental.pallas import tpu as pltpu

EPS = 1e-6
_LANES = 128
_SUBLANES = 8
_STRIP_ROWS = 512                  # rows per in-kernel strip (256 KiB in f32)
_MAX_BLK_BYTES = 4 << 20           # ~4 MiB per input per grid step (f32: 8192 rows)
_VMEM_LIMIT_BYTES = 40 << 20       # > v5e's 16 MiB default, < v7x's 64 MiB physical


def _charbonnier_kernel(x_ref, y_ref, o_ref):
    """Accumulate sum(sqrt((x-y)^2 + eps)) into an (8, 128) lane-shaped partial.

    Grid = (num_parts, inner).  The output block index depends only on the
    outer axis, so o_ref is resident across the inner (reduction) axis and
    acts as the accumulator.  Each grid step streams a
    (blk_strips, strip_rows, 128) block and reduces it strip-by-strip with a
    fori_loop, keeping f32 temporaries bounded regardless of block size.
    """
    i = pl.program_id(1)

    @pl.when(i == 0)
    def _():
        o_ref[...] = jnp.zeros_like(o_ref)

    blk_strips = x_ref.shape[0]        # static
    strip_rows = x_ref.shape[1]        # static, multiple of 8
    groups = strip_rows // _SUBLANES

    def strip_body(s, carry):
        x = x_ref[s].astype(jnp.float32)
        y = y_ref[s].astype(jnp.float32)
        d = x - y
        err = jnp.sqrt(d * d + jnp.float32(EPS))
        # (strip_rows,128) -> (groups,8,128); axis-0 sum is vreg-shaped VPU
        # adds only -- no cross-lane/sublane reduction in the hot loop.
        o_ref[...] += jnp.sum(err.reshape(groups, _SUBLANES, _LANES), axis=0)
        return carry

    lax.fori_loop(0, blk_strips, strip_body, 0)


def _choose_block_strips(strips_per_part, max_blk_strips):
    """Largest block (in strips) <= max that leaves minimal uncovered tail."""
    max_b = min(max_blk_strips, strips_per_part)
    best_b = max_b
    best_left = strips_per_part % max_b
    if best_left:
        for b in range(max_b - 1, max(1, max_b // 2) - 1, -1):
            left = strips_per_part % b
            if left < best_left:
                best_b, best_left = b, left
                if left == 0:
                    break
    return best_b


def _main_sum_pallas(x3, y3, num_parts, inner, blk_strips, strip_rows):
    """Sum of sqrt((x-y)^2+eps) over a (covered_strips, strip_rows, 128) slab."""
    covered = x3.size
    itemsize = jnp.dtype(x3.dtype).itemsize

    partials = pl.pallas_call(
        _charbonnier_kernel,
        out_shape=jax.ShapeDtypeStruct((num_parts * _SUBLANES, _LANES), jnp.float32),
        grid_spec=pltpu.PrefetchScalarGridSpec(
            num_scalar_prefetch=0,
            grid=(num_parts, inner),
            in_specs=[
                pl.BlockSpec((blk_strips, strip_rows, _LANES),
                             lambda p, i: (p * inner + i, 0, 0)),
                pl.BlockSpec((blk_strips, strip_rows, _LANES),
                             lambda p, i: (p * inner + i, 0, 0)),
            ],
            out_specs=pl.BlockSpec((_SUBLANES, _LANES), lambda p, i: (p, 0)),
        ),
        compiler_params=pltpu.CompilerParams(
            dimension_semantics=("parallel", "arbitrary"),
            vmem_limit_bytes=_VMEM_LIMIT_BYTES,
        ),
        cost_estimate=pl.CostEstimate(
            flops=4 * covered,
            transcendentals=covered,
            bytes_accessed=2 * covered * itemsize
            + num_parts * _SUBLANES * _LANES * 4,
        ),
    )(x3, y3)
    return jnp.sum(partials)


def l1_charbonnier_loss(x, y, *, max_block_bytes=_MAX_BLK_BYTES):
    """Pallas TPU implementation of L1_Charbonnier_loss.forward(X, Y)."""
    assert x.shape == y.shape, "X and Y must have the same shape"
    n = x.size
    xf = x.reshape(-1)
    yf = y.reshape(-1)

    itemsize = jnp.dtype(x.dtype).itemsize
    # Dtype-aware minimum sublane multiple: 8 (4B), 16 (2B), 32 (1B).
    sub = {4: _SUBLANES, 2: 2 * _SUBLANES, 1: 4 * _SUBLANES}.get(itemsize, _SUBLANES)

    total_rows = n // _LANES
    strip_rows = min(_STRIP_ROWS, (total_rows // sub) * sub)

    partial_sums = []
    covered = 0
    if strip_rows > 0:
        s_total = total_rows // strip_rows
        # v7x: always give both TensorCores work when there are >= 2 strips.
        num_parts = 2 if s_total >= 2 else 1
        s_per_part = s_total // num_parts
        max_blk_strips = max(1, (max_block_bytes // (itemsize * _LANES)) // strip_rows)
        blk_strips = _choose_block_strips(s_per_part, max_blk_strips)
        inner = s_per_part // blk_strips

        covered_strips = num_parts * inner * blk_strips
        covered = covered_strips * strip_rows * _LANES
        x_main = xf if covered == n else xf[:covered]
        y_main = yf if covered == n else yf[:covered]
        x3 = x_main.reshape(covered_strips, strip_rows, _LANES)
        y3 = y_main.reshape(covered_strips, strip_rows, _LANES)
        partial_sums.append(
            _main_sum_pallas(x3, y3, num_parts, inner, blk_strips, strip_rows))

    if covered < n:
        # Uncovered tail (< ~1 block): plain jnp, avoids padding the full arrays.
        xt = xf[covered:].astype(jnp.float32)
        yt = yf[covered:].astype(jnp.float32)
        dt = xt - yt
        partial_sums.append(jnp.sum(jnp.sqrt(dt * dt + jnp.float32(EPS))))

    total = partial_sums[0]
    for p in partial_sums[1:]:
        total = total + p
    return total / jnp.float32(n)


if __name__ == "__main__":
    key = jax.random.PRNGKey(0)
    kx, ky = jax.random.split(key)

    # Small NCHW shapes consistent with an image-restoration loss.
    x = jax.random.normal(kx, (2, 4, 16, 16), dtype=jnp.float32)
    y = jax.random.normal(ky, (2, 4, 16, 16), dtype=jnp.float32)
    loss = jax.block_until_ready(l1_charbonnier_loss(x, y))
    ref = jnp.mean(jnp.sqrt((x - y) ** 2 + EPS))
    assert jnp.allclose(loss, ref, rtol=1e-5, atol=1e-6), (loss, ref)

    # Extra correctness checks exercising the 2-part grid, multi-strip blocks,
    # the jnp tail, and accumulation across the inner (reduction) grid axis.
    for shape, kwargs in (((2, 3, 384, 384), {}),
                          ((4, 4, 128, 128), {"max_block_bytes": 256 << 10})):
        kxb, kyb = jax.random.split(jax.random.PRNGKey(1))
        xb = jax.random.normal(kxb, shape, dtype=jnp.float32)
        yb = jax.random.normal(kyb, shape, dtype=jnp.float32)
        got = jax.block_until_ready(l1_charbonnier_loss(xb, yb, **kwargs))
        want = jnp.mean(jnp.sqrt((xb - yb) ** 2 + EPS))
        assert jnp.allclose(got, want, rtol=1e-4, atol=1e-6), (shape, got, want)

    print("KERNEL_OK")
</pallas_src>

<mosaic_0001>
module attributes {stable_mosaic.version = 11 : i64} {
  func.func @_charbonnier_kernel(%arg0: i32, %arg1: i32, %arg2: memref<1x16x128xf32, #tpu.memory_space<vmem>>, %arg3: memref<1x16x128xf32, #tpu.memory_space<vmem>>, %arg4: memref<8x128xf32, #tpu.memory_space<vmem>>) attributes {dimension_semantics = [#tpu.dimension_semantics<parallel>, #tpu.dimension_semantics<arbitrary>], iteration_bounds = array<i64: 1, 1>, scalar_prefetch = 0 : i64, scratch_operands = 0 : i64, tpu.core_type = #tpu.core_type<tc>, window_params = [{transform_indices = @transform_0, window_bounds = array<i64: 1, 16, 128>}, {transform_indices = @transform_1, window_bounds = array<i64: 1, 16, 128>}, {transform_indices = @transform_2, window_bounds = array<i64: 8, 128>}]} {
    %c0_i32 = arith.constant 0 : i32
    %0 = arith.cmpi eq, %arg1, %c0_i32 : i32
    %1 = arith.extui %0 : i1 to i32
    %c0_i32_0 = arith.constant 0 : i32
    %2 = arith.cmpi ne, %1, %c0_i32_0 : i32
    scf.if %2 {
      %cst_10 = arith.constant 0.000000e+00 : f32
      %19 = vector.broadcast %cst_10 : f32 to vector<8x128xf32>
      %c0_11 = arith.constant 0 : index
      %c0_12 = arith.constant 0 : index
      %20 = vector.load %arg4[%c0_11, %c0_12] : memref<8x128xf32, #tpu.memory_space<vmem>>, vector<8x128xf32>
      tpu.vector_store %arg4[%c0_11, %c0_12], %19 {strides = array<i32>} : memref<8x128xf32, #tpu.memory_space<vmem>>, vector<8x128xf32>,
    } else {
    }
    %c0_i32_1 = arith.constant 0 : i32
    %3 = arith.index_cast %c0_i32_1 : i32 to index
    %c0 = arith.constant 0 : index
    %c0_2 = arith.constant 0 : index
    %4 = vector.load %arg2[%3, %c0, %c0_2] : memref<1x16x128xf32, #tpu.memory_space<vmem>>, vector<1x16x128xf32>
    %5 = vector.shape_cast %4 : vector<1x16x128xf32> to vector<16x128xf32>
    %6 = arith.index_cast %c0_i32_1 : i32 to index
    %c0_3 = arith.constant 0 : index
    %c0_4 = arith.constant 0 : index
    %7 = vector.load %arg3[%6, %c0_3, %c0_4] : memref<1x16x128xf32, #tpu.memory_space<vmem>>, vector<1x16x128xf32>
    %8 = vector.shape_cast %7 : vector<1x16x128xf32> to vector<16x128xf32>
    %9 = arith.subf %5, %8 : vector<16x128xf32>
    %10 = arith.mulf %9, %9 : vector<16x128xf32>
    %cst = arith.constant 9.99999997E-7 : f32
    %11 = vector.broadcast %cst : f32 to vector<16x128xf32>
    %12 = arith.addf %10, %11 : vector<16x128xf32>
    %13 = math.sqrt %12 : vector<16x128xf32>
    %c0_5 = arith.constant 0 : index
    %c0_6 = arith.constant 0 : index
    %14 = vector.load %arg4[%c0_5, %c0_6] : memref<8x128xf32, #tpu.memory_space<vmem>>, vector<8x128xf32>
    %15 = vector.shape_cast %13 : vector<16x128xf32> to vector<2x8x128xf32>
    %cst_7 = arith.constant dense<0.000000e+00> : vector<8x128xf32>
    %16 = vector.multi_reduction <add>, %15, %cst_7 [0] : vector<2x8x128xf32> to vector<8x128xf32>
    %17 = arith.addf %14, %16 : vector<8x128xf32>
    %c0_8 = arith.constant 0 : index
    %c0_9 = arith.constant 0 : index
    %18 = vector.load %arg4[%c0_8, %c0_9] : memref<8x128xf32, #tpu.memory_space<vmem>>, vector<8x128xf32>
    tpu.vector_store %arg4[%c0_8, %c0_9], %17 {strides = array<i32>} : memref<8x128xf32, #tpu.memory_space<vmem>>, vector<8x128xf32>,
    %c1_i32 = arith.constant 1 : i32
    return
  }
  func.func @transform_0(%arg0: i32, %arg1: i32) -> (i32, i32, i32) {
    %c1_i32 = arith.constant 1 : i32
    %0 = arith.muli %arg0, %c1_i32 : i32
    %1 = arith.addi %0, %arg1 : i32
    %c0_i32 = arith.constant 0 : i32
    %c0_i32_0 = arith.constant 0 : i32
    %c0_i32_1 = arith.constant 0 : i32
    return %1, %c0_i32, %c0_i32_0 : i32, i32, i32
  }
  func.func @transform_1(%arg0: i32, %arg1: i32) -> (i32, i32, i32) {
    %c1_i32 = arith.constant 1 : i32
    %0 = arith.muli %arg0, %c1_i32 : i32
    %1 = arith.addi %0, %arg1 : i32
    %c0_i32 = arith.constant 0 : i32
    %c0_i32_0 = arith.constant 0 : i32
    %c0_i32_1 = arith.constant 0 : i32
    return %1, %c0_i32, %c0_i32_0 : i32, i32, i32
  }
  func.func @transform_2(%arg0: i32, %arg1: i32) -> (i32, i32) {
    %c0_i32 = arith.constant 0 : i32
    %c0_i32_0 = arith.constant 0 : i32
    return %arg0, %c0_i32 : i32, i32
  }
}

</mosaic_0001>

<llo_original>
// kernel: tpu_custom_call.1
$region0: #{tpu_custom_call.1}
  #allocation0 [shape = 'u32[]', space=smem, size = 0x4, offset = 0x4, fixed_abs, tag = 'smem constant byte address 0x4 - core index']
  #allocation1 [shape = 'u32[72,128]{1,0:T(1,128)}', space=vmem, size = 0x9000, scoped, tag = 'internal scratch']
  %s0 = inlined_call_operand.hbm [shape: f32[1,16,128], index: 0, kind: input, shape index: {}]
  %s1 = inlined_call_operand.hbm [shape: f32[1,16,128], index: 1, kind: input, shape index: {}]
  %s2 = inlined_call_operand.hbm [shape: f32[8,128], index: 2, kind: output, shape index: {}]
  %s3 = sld [smem:[#allocation0]]
  $region30: #{tpu_custom_call.1} parent=0
    _
  %s5 = ssub.s32 1, %s3
  %s6 = scalar_select 0, %s5, %s3
  $region1: #{tpu_custom_call.1} parent=0
    #allocation2 [shape = 'u8[8192]{0}', space=vmem, size = 0x2000, scoped, tag = 'input window, operand 0, single buffered']
    #allocation3 [shape = 's32[1]{0}', space=sflag, size = 0x4, scoped, tag = 'scoped memory for tpu_custom_call.1']
    #allocation4 [shape = 's32[1]{0}', space=sflag, size = 0x4, scoped, tag = 'scoped memory for tpu_custom_call.1']
    #allocation5 [shape = 'u8[8192]{0}', space=vmem, size = 0x2000, scoped, tag = 'input window, operand 1, single buffered']
    #allocation6 [shape = 's32[1]{0}', space=sflag, size = 0x4, scoped, tag = 'scoped memory for tpu_custom_call.1']
    #allocation7 [shape = 'u8[4096]{0}', space=vmem, size = 0x1000, scoped, tag = 'output window, operand 0, single buffered']
    %7 = vsyncpa [#allocation3], 0
    %8 = vsyncpa [#allocation6], 0
    %9 = vsyncpa [#allocation4], 0
    // Predicated region
    $region2: #{tpu_custom_call.1} parent=1 // pred_check
      _
    $region3: #{tpu_custom_call.1} parent=1 // pred_check_branch
      %11 = sbr.rel (0) target = $region5
    $region4: #{tpu_custom_call.1} parent=1 // pred_region
      %s12 = sadd.s32 0, 0
      %14 = vsyncadd [#allocation3], 0
      %s15 = smul.addr %s12, 2
      %s16 = smul.addr %s15, 8
      %s17 = scalar_lea.hbm %s0, %s16
      %s18 = sshll.u32 %s17, 4
      %s19 = int_to_ptr.hbm [resolvable:$true] %s18
      %s20 = sshll.u32 [#allocation2], 4
      %s21 = int_to_ptr.vmem [resolvable:$true] %s20
      %26 = dma.hbm_to_vmem [thread:$0]  %s19, 256, %s21, [#allocation3], 128, 128, 8
    $region5: #{tpu_custom_call.1} parent=1 // pred_fallthru
      _
    // Predicated region
    $region6: #{tpu_custom_call.1} parent=1 // pred_check
      _
    $region7: #{tpu_custom_call.1} parent=1 // pred_check_branch
      %28 = sbr.rel (0) target = $region9
    $region8: #{tpu_custom_call.1} parent=1 // pred_region
      %s29 = sadd.s32 0, 0
      %31 = vsyncadd [#allocation6], 0
      %s32 = smul.addr %s29, 2
      %s33 = smul.addr %s32, 8
      %s34 = scalar_lea.hbm %s1, %s33
      %s35 = sshll.u32 %s34, 4
      %s36 = int_to_ptr.hbm [resolvable:$true] %s35
      %s37 = sshll.u32 [#allocation5], 4
      %s38 = int_to_ptr.vmem [resolvable:$true] %s37
      %43 = dma.hbm_to_vmem [thread:$0]  %s36, 256, %s38, [#allocation6], 128, 128, 8
    $region9: #{tpu_custom_call.1} parent=1 // pred_fallthru
      _
    // Predicated region
    $region10: #{tpu_custom_call.1} parent=1 // pred_check
      _
    $region11: #{tpu_custom_call.1} parent=1 // pred_check_branch
      %45 = sbr.rel (0) target = $region13
    $region12: #{tpu_custom_call.1} parent=1 // pred_region
      %47 = dma.done [#allocation3], 256
    $region13: #{tpu_custom_call.1} parent=1 // pred_fallthru
      _
    // Predicated region
    $region14: #{tpu_custom_call.1} parent=1 // pred_check
      _
    $region15: #{tpu_custom_call.1} parent=1 // pred_check_branch
      %49 = sbr.rel (0) target = $region17
    $region16: #{tpu_custom_call.1} parent=1 // pred_region
      %51 = dma.done [#allocation6], 256
    $region17: #{tpu_custom_call.1} parent=1 // pred_fallthru
      _
    %s52 = sadd.s32 0, 0
    %s53 = sadd.s32 0, 0
    %p54 = scmp.eq.s32.totalorder 0, 0
    // Predicated region
    $region18: #{tpu_custom_call.1} parent=1 // pred_check
      %p55 = pneg %p54
    $region19: #{tpu_custom_call.1} parent=1 // pred_check_branch
      %57 = sbr.rel (%p55) target = $region21
    $region20: #{tpu_custom_call.1} parent=1 // pred_region
      %58 = vst [vmem:[#allocation7] sm:$0xff] 0.0
    $region21: #{tpu_custom_call.1} parent=1 // pred_fallthru
      _
    %v59 = vld [vmem:[#allocation2] sm:$0xff]
    %v60 = vld [vmem:[#allocation2 + $0x8] sm:$0xff]
    %v61 = vld [vmem:[#allocation5] sm:$0xff]
    %v62 = vld [vmem:[#allocation5 + $0x8] sm:$0xff]
    %v63 = vsub.f32 %v59, %v61
    %v64 = vsub.f32 %v60, %v62
    %v65 = vmul.f32 %v63, %v63
    %v66 = vmul.f32 %v64, %v64
    %v67 = vadd.f32 %v65, 1e-06
    %v68 = vadd.f32 %v66, 1e-06
    %v69 = vrsqrt.pop %v67
    %v70 = vmul.f32 %v69, %v67
    %v71 = vmul.f32 %v70, %v69
    %v72 = vmul.f32 0.5, %v71
    %v73 = vsub.f32 1.5, %v72
    %v74 = vmul.f32 %v69, %v73
    %v75 = vmul.f32 %v67, %v74
    %vm76 = vcmp.eq.f32.partialorder %v67, inf
    %v77 = vsel %vm76, %v67, %v75
    %vm78 = vcmp.eq.f32.partialorder %v67, 0.0
    %v79 = vand.u32 %v67, 2147483648
    %v80 = vsel %vm78, %v79, %v77
    %v81 = vrsqrt.pop %v68
    %v82 = vmul.f32 %v81, %v68
    %v83 = vmul.f32 %v82, %v81
    %v84 = vmul.f32 0.5, %v83
    %v85 = vsub.f32 1.5, %v84
    %v86 = vmul.f32 %v81, %v85
    %v87 = vmul.f32 %v68, %v86
    %vm88 = vcmp.eq.f32.partialorder %v68, inf
    %v89 = vsel %vm88, %v68, %v87
    %vm90 = vcmp.eq.f32.partialorder %v68, 0.0
    %v91 = vand.u32 %v68, 2147483648
    %v92 = vsel %vm90, %v91, %v89
    %v93 = vld [vmem:[#allocation7] sm:$0xff]
    %v94 = vadd.f32 %v80, %v92
    %v95 = vadd.f32 %v93, %v94
    %96 = vst [vmem:[#allocation7] sm:$0xff] %v95
    // Predicated region
    $region22: #{tpu_custom_call.1} parent=1 // pred_check
      _
    $region23: #{tpu_custom_call.1} parent=1 // pred_check_branch
      %98 = sbr.rel (0) target = $region25
    $region24: #{tpu_custom_call.1} parent=1 // pred_region
      %100 = vsyncadd [#allocation4], 0
      %s102 = sshll.u32 [#allocation7], 4
      %s103 = int_to_ptr.vmem [resolvable:$true] %s102
      %s104 = sshll.u32 %s2, 4
      %s105 = int_to_ptr.hbm [resolvable:$true] %s104
      %107 = dma.vmem_to_hbm [thread:$0]  %s103, 128, %s105, [#allocation4]
    $region25: #{tpu_custom_call.1} parent=1 // pred_fallthru
      _
    // Predicated region
    $region26: #{tpu_custom_call.1} parent=1 // pred_check
      _
    $region27: #{tpu_custom_call.1} parent=1 // pred_check_branch
      %109 = sbr.rel (0) target = $region29
    $region28: #{tpu_custom_call.1} parent=1 // pred_region
      %111 = dma.done [#allocation4], 128
    $region29: #{tpu_custom_call.1} parent=1 // pred_fallthru
      _
    %112 = vsyncpa [#allocation3], 1
    %113 = vsyncpa [#allocation6], 1
    %114 = vsyncpa [#allocation4], 1

</llo_original>
